<compile_context>
chip_gen: v7x
topology: tpu7x:2x2x1
jax: 0.10.0
libtpu: 0.0.40
codegen_flags: <defaults>
</compile_context>

<pallas_src>
import functools

import jax
import jax.numpy as jnp
from jax.experimental import pallas as pl
from jax.experimental.pallas import tpu as pltpu

EPS = 1e-5          # PyTorch BatchNorm2d default
LANES = 128
SUBLANES = 8
VMEM_LIMIT = 32 * 1024 * 1024  # explicit; safe on v7x (64 MiB/TC) and v5e/v6e


def _round_up(x, m):
    return ((x + m - 1) // m) * m


def _conv_stats_kernel(p_ref, w_ref, conv_ref, sum_ref, sq_ref):
    """One M-block: conv tile = patches @ W (bf16 in, f32 acc) + stats partials.

    sum_ref / sq_ref are resident accumulators (same block every grid step).
    """
    @pl.when(pl.program_id(0) == 0)
    def _init():
        sum_ref[...] = jnp.zeros_like(sum_ref)
        sq_ref[...] = jnp.zeros_like(sq_ref)

    acc = jnp.dot(p_ref[...], w_ref[...], preferred_element_type=jnp.float32)
    conv_ref[...] = acc                                     # (bm, Cp) lane-dense
    sum_ref[...] += jnp.sum(acc, axis=0, keepdims=True)     # (1, Cp)
    sq_ref[...] += jnp.sum(acc * acc, axis=0, keepdims=True)


def _bn_relu_kernel(conv_ref, sum_ref, sq_ref, gamma_ref, beta_ref, out_ref, *,
                    count):
    """Apply training-mode BatchNorm (biased batch stats) + ReLU to one block."""
    inv_n = 1.0 / count
    mean = sum_ref[...] * inv_n                              # (1, Cp)
    # One-pass variance; clamp >= 0 to guard against cancellation (f32 math).
    var = jnp.maximum(sq_ref[...] * inv_n - mean * mean, 0.0)
    scale = gamma_ref[...] * jax.lax.rsqrt(var + EPS)
    shift = beta_ref[...] - mean * scale
    out_ref[...] = jnp.maximum(conv_ref[...] * scale + shift, 0.0)


def bn_conv2d(x_nchw, w_oihw, gamma, beta, *, stride=1, padding=1, block_m=256):
    """Fused Conv2d(bias=False) + BatchNorm2d(training stats) + ReLU (groups=1)."""
    N, Cin, H, W = x_nchw.shape
    Cout, _, KH, KW = w_oihw.shape
    Ho = (H + 2 * padding - KH) // stride + 1
    Wo = (W + 2 * padding - KW) // stride + 1
    M = N * Ho * Wo                     # rows of the im2col matrix
    K = KH * KW * Cin                   # single contraction dim
    Cp = _round_up(Cout, LANES)         # lane-dense output channels

    # ---- wrapper glue: im2col (NCHW -> padded NHWC -> (M, K)), HWIO weights ----
    x = jnp.transpose(x_nchw, (0, 2, 3, 1)).astype(jnp.float32)
    x = jnp.pad(x, ((0, 0), (padding, padding), (padding, padding), (0, 0)))
    taps = []
    for kh in range(KH):
        for kw in range(KW):
            taps.append(x[:, kh:kh + stride * (Ho - 1) + 1:stride,
                          kw:kw + stride * (Wo - 1) + 1:stride, :])
    patches = jnp.concatenate(taps, axis=-1).reshape(M, K)   # (M, KH*KW*Cin)

    w2 = jnp.transpose(w_oihw, (2, 3, 1, 0)).astype(jnp.float32).reshape(K, Cout)
    w2 = jnp.pad(w2, ((0, 0), (0, Cp - Cout)))
    gamma_p = jnp.pad(gamma.astype(jnp.float32), (0, Cp - Cout)).reshape(1, Cp)
    beta_p = jnp.pad(beta.astype(jnp.float32), (0, Cp - Cout)).reshape(1, Cp)

    bm = min(block_m, _round_up(M, SUBLANES))
    Mp = _round_up(M, bm)
    # Zero-padded rows contribute 0 to conv / sum / sumsq; stats divide by real M.
    patches = jnp.pad(patches, ((0, Mp - M), (0, 0))).astype(jnp.bfloat16)
    w_bf16 = w2.astype(jnp.bfloat16)
    grid = (Mp // bm,)

    # ---- pass 1: conv (one bf16 matmul per block) + per-channel sum / sumsq ----
    conv, ch_sum, ch_sq = pl.pallas_call(
        _conv_stats_kernel,
        grid=grid,
        in_specs=[
            pl.BlockSpec((bm, K), lambda i: (i, 0)),
            pl.BlockSpec((K, Cp), lambda i: (0, 0)),
        ],
        out_specs=[
            pl.BlockSpec((bm, Cp), lambda i: (i, 0)),
            pl.BlockSpec((1, Cp), lambda i: (0, 0)),   # resident accumulator
            pl.BlockSpec((1, Cp), lambda i: (0, 0)),   # resident accumulator
        ],
        out_shape=[
            jax.ShapeDtypeStruct((Mp, Cp), jnp.float32),
            jax.ShapeDtypeStruct((1, Cp), jnp.float32),
            jax.ShapeDtypeStruct((1, Cp), jnp.float32),
        ],
        compiler_params=pltpu.CompilerParams(
            dimension_semantics=("arbitrary",),        # stats reduce over M axis
            vmem_limit_bytes=VMEM_LIMIT,
        ),
    )(patches, w_bf16)

    # ---- pass 2: BatchNorm (batch stats) + ReLU, lane-dense output ----
    out_p = pl.pallas_call(
        functools.partial(_bn_relu_kernel, count=float(M)),
        grid=grid,
        in_specs=[
            pl.BlockSpec((bm, Cp), lambda i: (i, 0)),
            pl.BlockSpec((1, Cp), lambda i: (0, 0)),
            pl.BlockSpec((1, Cp), lambda i: (0, 0)),
            pl.BlockSpec((1, Cp), lambda i: (0, 0)),
            pl.BlockSpec((1, Cp), lambda i: (0, 0)),
        ],
        out_specs=pl.BlockSpec((bm, Cp), lambda i: (i, 0)),
        out_shape=jax.ShapeDtypeStruct((Mp, Cp), jnp.float32),
        compiler_params=pltpu.CompilerParams(
            dimension_semantics=("parallel",),         # independent blocks
            vmem_limit_bytes=VMEM_LIMIT,
        ),
    )(conv, ch_sum, ch_sq, gamma_p, beta_p)

    out = out_p[:M, :Cout].reshape(N, Ho, Wo, Cout)
    return jnp.transpose(out, (0, 3, 1, 2))  # back to NCHW


def reference_bn_conv2d(x, w, gamma, beta, *, stride=1, padding=1):
    conv = jax.lax.conv_general_dilated(
        x, w, window_strides=(stride, stride),
        padding=[(padding, padding), (padding, padding)],
        dimension_numbers=("NCHW", "OIHW", "NCHW"),
    )
    mean = conv.mean(axis=(0, 2, 3), keepdims=True)
    var = jnp.square(conv - mean).mean(axis=(0, 2, 3), keepdims=True)
    y = (conv - mean) * jax.lax.rsqrt(var + EPS)
    y = y * gamma.reshape(1, -1, 1, 1) + beta.reshape(1, -1, 1, 1)
    return jnp.maximum(y, 0.0)


if __name__ == "__main__":
    # BN_Conv2d(in_channels=4, out_channels=8, kernel_size=3, stride=1, padding=1)
    N, Cin, H, W = 2, 4, 16, 16
    Cout, KH, KW = 8, 3, 3
    stride, padding = 1, 1

    key = jax.random.PRNGKey(0)
    kx, kw = jax.random.split(key)
    x = jax.random.normal(kx, (N, Cin, H, W), dtype=jnp.float32)
    w = jax.random.normal(kw, (Cout, Cin, KH, KW), dtype=jnp.float32) * (
        2.0 / (Cin * KH * KW)) ** 0.5
    gamma = jnp.ones((Cout,), jnp.float32)   # BatchNorm2d weight init
    beta = jnp.zeros((Cout,), jnp.float32)   # BatchNorm2d bias init

    out = jax.block_until_ready(
        bn_conv2d(x, w, gamma, beta, stride=stride, padding=padding))
    ref = jax.block_until_ready(
        reference_bn_conv2d(x, w, gamma, beta, stride=stride, padding=padding))

    assert out.shape == (N, Cout, H, W), out.shape
    # bf16 matmul operands (f32 accumulation) => loosened tolerance vs f32 ref.
    assert jnp.allclose(out, ref, rtol=5e-2, atol=5e-2), float(
        jnp.max(jnp.abs(out - ref)))

    print("KERNEL_OK")
</pallas_src>

<mosaic_0001>
module attributes {stable_mosaic.version = 11 : i64} {
  func.func @_conv_stats_kernel(%arg0: i32, %arg1: memref<256x36xbf16, #tpu.memory_space<vmem>>, %arg2: memref<36x128xbf16, #tpu.memory_space<vmem>>, %arg3: memref<256x128xf32, #tpu.memory_space<vmem>>, %arg4: memref<1x128xf32, #tpu.memory_space<vmem>>, %arg5: memref<1x128xf32, #tpu.memory_space<vmem>>) attributes {dimension_semantics = [#tpu.dimension_semantics<arbitrary>], iteration_bounds = array<i64: 2>, scalar_prefetch = 0 : i64, scratch_operands = 0 : i64, tpu.core_type = #tpu.core_type<tc>, window_params = [{transform_indices = @transform_0, window_bounds = array<i64: 256, 36>}, {pipeline_mode = #tpu.pipeline_mode<synchronous>, transform_indices = @transform_1, window_bounds = array<i64: 36, 128>}, {transform_indices = @transform_2, window_bounds = array<i64: 256, 128>}, {pipeline_mode = #tpu.pipeline_mode<synchronous>, transform_indices = @transform_3, window_bounds = array<i64: 1, 128>}, {pipeline_mode = #tpu.pipeline_mode<synchronous>, transform_indices = @transform_4, window_bounds = array<i64: 1, 128>}]} {
    %c0_i32 = arith.constant 0 : i32
    %0 = arith.cmpi eq, %arg0, %c0_i32 : i32
    %1 = arith.extui %0 : i1 to i32
    %c0_i32_0 = arith.constant 0 : i32
    %2 = arith.cmpi ne, %1, %c0_i32_0 : i32
    scf.if %2 {
      %cst_16 = arith.constant 0.000000e+00 : f32
      %18 = vector.broadcast %cst_16 : f32 to vector<1x128xf32>
      %c0_17 = arith.constant 0 : index
      %c0_18 = arith.constant 0 : index
      %19 = vector.load %arg4[%c0_17, %c0_18] : memref<1x128xf32, #tpu.memory_space<vmem>>, vector<1x128xf32>
      tpu.vector_store %arg4[%c0_17, %c0_18], %18 {strides = array<i32>} : memref<1x128xf32, #tpu.memory_space<vmem>>, vector<1x128xf32>,
      %cst_19 = arith.constant 0.000000e+00 : f32
      %20 = vector.broadcast %cst_19 : f32 to vector<1x128xf32>
      %c0_20 = arith.constant 0 : index
      %c0_21 = arith.constant 0 : index
      %21 = vector.load %arg5[%c0_20, %c0_21] : memref<1x128xf32, #tpu.memory_space<vmem>>, vector<1x128xf32>
      tpu.vector_store %arg5[%c0_20, %c0_21], %20 {strides = array<i32>} : memref<1x128xf32, #tpu.memory_space<vmem>>, vector<1x128xf32>,
    } else {
    }
    %c0 = arith.constant 0 : index
    %c0_1 = arith.constant 0 : index
    %3 = vector.load %arg1[%c0, %c0_1] : memref<256x36xbf16, #tpu.memory_space<vmem>>, vector<256x36xbf16>
    %c0_2 = arith.constant 0 : index
    %c0_3 = arith.constant 0 : index
    %4 = vector.load %arg2[%c0_2, %c0_3] : memref<36x128xbf16, #tpu.memory_space<vmem>>, vector<36x128xbf16>
    %cst = arith.constant dense<0.000000e+00> : vector<256x128xf32>
    %5 = tpu.matmul %3, %4, %cst {dimension_numbers = #tpu.dot_dimension_numbers<[1], [0], [0], [1], [0, 0, 1, 1], [], []>} : vector<256x36xbf16>, vector<36x128xbf16>, vector<256x128xf32> -> vector<256x128xf32>
    %c0_4 = arith.constant 0 : index
    %c0_5 = arith.constant 0 : index
    %6 = vector.load %arg3[%c0_4, %c0_5] : memref<256x128xf32, #tpu.memory_space<vmem>>, vector<256x128xf32>
    tpu.vector_store %arg3[%c0_4, %c0_5], %5 {strides = array<i32>} : memref<256x128xf32, #tpu.memory_space<vmem>>, vector<256x128xf32>,
    %c0_6 = arith.constant 0 : index
    %c0_7 = arith.constant 0 : index
    %7 = vector.load %arg4[%c0_6, %c0_7] : memref<1x128xf32, #tpu.memory_space<vmem>>, vector<1x128xf32>
    %cst_8 = arith.constant dense<0.000000e+00> : vector<128xf32>
    %8 = vector.multi_reduction <add>, %5, %cst_8 [0] : vector<256x128xf32> to vector<128xf32>
    %9 = vector.shape_cast %8 : vector<128xf32> to vector<1x128xf32>
    %10 = arith.addf %7, %9 : vector<1x128xf32>
    %c0_9 = arith.constant 0 : index
    %c0_10 = arith.constant 0 : index
    %11 = vector.load %arg4[%c0_9, %c0_10] : memref<1x128xf32, #tpu.memory_space<vmem>>, vector<1x128xf32>
    tpu.vector_store %arg4[%c0_9, %c0_10], %10 {strides = array<i32>} : memref<1x128xf32, #tpu.memory_space<vmem>>, vector<1x128xf32>,
    %c0_11 = arith.constant 0 : index
    %c0_12 = arith.constant 0 : index
    %12 = vector.load %arg5[%c0_11, %c0_12] : memref<1x128xf32, #tpu.memory_space<vmem>>, vector<1x128xf32>
    %13 = arith.mulf %5, %5 : vector<256x128xf32>
    %cst_13 = arith.constant dense<0.000000e+00> : vector<128xf32>
    %14 = vector.multi_reduction <add>, %13, %cst_13 [0] : vector<256x128xf32> to vector<128xf32>
    %15 = vector.shape_cast %14 : vector<128xf32> to vector<1x128xf32>
    %16 = arith.addf %12, %15 : vector<1x128xf32>
    %c0_14 = arith.constant 0 : index
    %c0_15 = arith.constant 0 : index
    %17 = vector.load %arg5[%c0_14, %c0_15] : memref<1x128xf32, #tpu.memory_space<vmem>>, vector<1x128xf32>
    tpu.vector_store %arg5[%c0_14, %c0_15], %16 {strides = array<i32>} : memref<1x128xf32, #tpu.memory_space<vmem>>, vector<1x128xf32>,
    return
  }
  func.func @transform_0(%arg0: i32) -> (i32, i32) {
    %c0_i32 = arith.constant 0 : i32
    %c0_i32_0 = arith.constant 0 : i32
    return %arg0, %c0_i32 : i32, i32
  }
  func.func @transform_1(%arg0: i32) -> (i32, i32) {
    %c0_i32 = arith.constant 0 : i32
    %c0_i32_0 = arith.constant 0 : i32
    %c0_i32_1 = arith.constant 0 : i32
    return %c0_i32, %c0_i32_0 : i32, i32
  }
  func.func @transform_2(%arg0: i32) -> (i32, i32) {
    %c0_i32 = arith.constant 0 : i32
    %c0_i32_0 = arith.constant 0 : i32
    return %arg0, %c0_i32 : i32, i32
  }
  func.func @transform_3(%arg0: i32) -> (i32, i32) {
    %c0_i32 = arith.constant 0 : i32
    %c0_i32_0 = arith.constant 0 : i32
    %c0_i32_1 = arith.constant 0 : i32
    return %c0_i32, %c0_i32_0 : i32, i32
  }
  func.func @transform_4(%arg0: i32) -> (i32, i32) {
    %c0_i32 = arith.constant 0 : i32
    %c0_i32_0 = arith.constant 0 : i32
    %c0_i32_1 = arith.constant 0 : i32
    return %c0_i32, %c0_i32_0 : i32, i32
  }
}

</mosaic_0001>

<llo_original>
// kernel: tpu_custom_call.1
$region0: #{tpu_custom_call.1}
  #allocation0 [shape = 'u32[]', space=smem, size = 0x4, offset = 0x4, fixed_abs, tag = 'smem constant byte address 0x4 - core index']
  #allocation1 [shape = 'u32[144,128]{1,0:T(1,128)}', space=vmem, size = 0x12000, scoped, tag = 'internal scratch']
  %s0 = inlined_call_operand.vmem [shape: bf16[512,36], index: 0, kind: input, shape index: {}]
  %s1 = inlined_call_operand.vmem [shape: bf16[36,128], index: 1, kind: input, shape index: {}]
  %s2 = inlined_call_operand.hbm [shape: f32[512,128], index: 2, kind: output, shape index: {0}]
  %s3 = inlined_call_operand.hbm [shape: f32[1,128], index: 3, kind: output, shape index: {1}]
  %s4 = inlined_call_operand.hbm [shape: f32[1,128], index: 4, kind: output, shape index: {2}]
  %5 = xla_tuple %s2, %s3, %s4
  %s6 = sld [smem:[#allocation0]]
  $region61: #{tpu_custom_call.1} parent=0
    _
  %s8 = ssub.s32 1, %s6
  %s9 = scalar_select 0, %s8, %s6
  $region1: #{tpu_custom_call.1} parent=0
    #allocation2 [shape = 'u8[262144]{0}', space=vmem, size = 0x40000, scoped, tag = 'output window, operand 0']
    #allocation3 [shape = 's32[2]{0}', space=sflag, size = 0x8, scoped, tag = 'scoped memory for tpu_custom_call.1']
    #allocation4 [shape = 'u8[512]{0}', space=vmem, size = 0x400, scoped, tag = 'output window, operand 1, single buffered']
    #allocation5 [shape = 's32[1]{0}', space=sflag, size = 0x4, scoped, tag = 'scoped memory for tpu_custom_call.1']
    #allocation6 [shape = 'u8[512]{0}', space=vmem, size = 0x400, scoped, tag = 'output window, operand 2, single buffered']
    %10 = vsyncpa [#allocation3], 0
    %s11 = scalar_lea.sflag [#allocation3], 1
    %12 = vsyncpa %s11, 0
    %13 = vsyncpa [#allocation5], 0
    loop: start=0, step=1, limit=4
    $region2: #{tpu_custom_call.1} parent=1 // loop_pre_header
      _
    $region3: #{tpu_custom_call.1} parent=1 // loop_header
      %s15 = sphi 0, %s19
      %p16 = scmp.ge.s32.totalorder %s15, 4
      %s25 = sphi 0, %s27
      %s28 = sphi 0, %s25
      %s29 = sphi 0, %s28
      %s45 = sphi 0, %s29
      %s49 = sphi 0, %s49
      %s51 = sphi 0, %s49
      %s52 = sphi 0, %s51
      %s66 = sphi 0, %s52
      %s72 = sphi 0, %s74
      %s75 = sphi 0, %s72
      %s76 = sphi 0, %s75
      %s92 = sphi 0, %s76
      %s96 = sphi 0, %s96
      %s98 = sphi 0, %s96
      %s99 = sphi 0, %s98
      %s113 = sphi 0, %s99
      %s117 = sphi 0, %s117
      %s119 = sphi 0, %s117
      %s120 = sphi 0, %s119
      %s134 = sphi 0, %s120
    $region4: #{tpu_custom_call.1} parent=1 // loop_header_branch
      %18 = sbr.rel (%p16) target = $region8
    $region5: #{tpu_custom_call.1} parent=1 // loop_body
      %s20 = ssub.s32 %s15, 1
      %s21 = ssub.s32 %s15, 2
      %s22 = sadd.s32 %s15, 1
      %s23 = ssub.s32 %s15, %s22
      %p24 = scmp.eq.s32.totalorder %s23, 0
      %s26 = sadd.s32 %s25, 1
      %s27 = scalar_select %p24, %s25, %s26
      %p30 = pneg %p24
      %p31 = scmp.eq.s32.totalorder %s15, 1
      %p32 = por %p30, %p31
      %p33 = scmp.ne.s32.totalorder %s25, %s28
      %p34 = scmp.eq.s32.totalorder %s15, 0
      %p35 = por %p33, %p34
      %p36 = scmp.ne.s32.totalorder %s25, %s28
      %p37 = scmp.eq.s32.totalorder %s20, 1
      %p38 = por %p36, %p37
      %p39 = scmp.ne.s32.totalorder %s28, %s29
      %p40 = scmp.eq.s32.totalorder %s20, 0
      %p41 = por %p39, %p40
      %p42 = scmp.ne.s32.totalorder %s28, %s29
      %p43 = scmp.eq.s32.totalorder %s21, 1
      %p44 = por %p42, %p43
      %p46 = scmp.ne.s32.totalorder %s29, %s45
      %p47 = scmp.eq.s32.totalorder %s21, 0
      %p48 = por %p46, %p47
      %s50 = sadd.s32 %s49, 1
      %p53 = scmp.eq.s32.totalorder %s15, 1
      %p54 = scmp.ne.s32.totalorder %s49, %s51
      %p55 = scmp.eq.s32.totalorder %s15, 0
      %p56 = por %p54, %p55
      %p57 = scmp.ne.s32.totalorder %s49, %s51
      %p58 = scmp.eq.s32.totalorder %s20, 1
      %p59 = por %p57, %p58
      %p60 = scmp.ne.s32.totalorder %s51, %s52
      %p61 = scmp.eq.s32.totalorder %s20, 0
      %p62 = por %p60, %p61
      %p63 = scmp.ne.s32.totalorder %s51, %s52
      %p64 = scmp.eq.s32.totalorder %s21, 1
      %p65 = por %p63, %p64
      %p67 = scmp.ne.s32.totalorder %s52, %s66
      %p68 = scmp.eq.s32.totalorder %s21, 0
      %p69 = por %p67, %p68
      %s70 = ssub.s32 %s15, %s22
      %p71 = scmp.eq.s32.totalorder %s70, 0
      %s73 = sadd.s32 %s72, 1
      %s74 = scalar_select %p71, %s72, %s73
      %p77 = pneg %p71
      %p78 = scmp.eq.s32.totalorder %s15, 1
      %p79 = por %p77, %p78
      %p80 = scmp.ne.s32.totalorder %s72, %s75
      %p81 = scmp.eq.s32.totalorder %s15, 0
      %p82 = por %p80, %p81
      %p83 = scmp.ne.s32.totalorder %s72, %s75
      %p84 = scmp.eq.s32.totalorder %s20, 1
      %p85 = por %p83, %p84
      %p86 = scmp.ne.s32.totalorder %s75, %s76
      %p87 = scmp.eq.s32.totalorder %s20, 0
      %p88 = por %p86, %p87
      %p89 = scmp.ne.s32.totalorder %s75, %s76
      %p90 = scmp.eq.s32.totalorder %s21, 1
      %p91 = por %p89, %p90
      %p93 = scmp.ne.s32.totalorder %s76, %s92
      %p94 = scmp.eq.s32.totalorder %s21, 0
      %p95 = por %p93, %p94
      %s97 = sadd.s32 %s96, 1
      %p100 = scmp.eq.s32.totalorder %s15, 1
      %p101 = scmp.ne.s32.totalorder %s96, %s98
      %p102 = scmp.eq.s32.totalorder %s15, 0
      %p103 = por %p101, %p102
      %p104 = scmp.ne.s32.totalorder %s96, %s98
      %p105 = scmp.eq.s32.totalorder %s20, 1
      %p106 = por %p104, %p105
      %p107 = scmp.ne.s32.totalorder %s98, %s99
      %p108 = scmp.eq.s32.totalorder %s20, 0
      %p109 = por %p107, %p108
      %p110 = scmp.ne.s32.totalorder %s98, %s99
      %p111 = scmp.eq.s32.totalorder %s21, 1
      %p112 = por %p110, %p111
      %p114 = scmp.ne.s32.totalorder %s99, %s113
      %p115 = scmp.eq.s32.totalorder %s21, 0
      %p116 = por %p114, %p115
      %s118 = sadd.s32 %s117, 1
      %p121 = scmp.eq.s32.totalorder %s15, 1
      %p122 = scmp.ne.s32.totalorder %s117, %s119
      %p123 = scmp.eq.s32.totalorder %s15, 0
      %p124 = por %p122, %p123
      %p125 = scmp.ne.s32.totalorder %s117, %s119
      %p126 = scmp.eq.s32.totalorder %s20, 1
      %p127 = por %p125, %p126
      %p128 = scmp.ne.s32.totalorder %s119, %s120
      %p129 = scmp.eq.s32.totalorder %s20, 0
      %p130 = por %p128, %p129
      %p131 = scmp.ne.s32.totalorder %s119, %s120
      %p132 = scmp.eq.s32.totalorder %s21, 1
      %p133 = por %p131, %p132
      %p135 = scmp.ne.s32.totalorder %s120, %s134
      %p136 = scmp.eq.s32.totalorder %s21, 0
      %p137 = por %p135, %p136
      %p138 = scmp.le.s32.totalorder 1, %s15
      %p139 = scmp.lt.s32.totalorder %s15, 3
      %p140 = pnand %p138, %p139
      %p141 = pneg %p140
      // Predicated region
      $region9: #{tpu_custom_call.1} parent=5 // pred_check
        _
      $region10: #{tpu_custom_call.1} parent=5 // pred_check_branch
        %143 = sbr.rel (%p140) target = $region12
      $region11: #{tpu_custom_call.1} parent=5 // pred_region
        %s144 = ssub.s32 %s15, 1
        // Predicated region
        $region13: #{tpu_custom_call.1} parent=11 // pred_check
          %p145 = pneg %p62
        $region14: #{tpu_custom_call.1} parent=11 // pred_check_branch
          %147 = sbr.rel (%p145) target = $region16
        $region15: #{tpu_custom_call.1} parent=11 // pred_region
          _
        $region16: #{tpu_custom_call.1} parent=11 // pred_fallthru
          _
      $region12: #{tpu_custom_call.1} parent=5 // pred_fallthru
        _
      %p148 = scmp.lt.s32.totalorder %s15, 2
      // Predicated region
      $region17: #{tpu_custom_call.1} parent=5 // pred_check
        %p149 = pneg %p148
      $region18: #{tpu_custom_call.1} parent=5 // pred_check_branch
        %151 = sbr.rel (%p149) target = $region20
      $region19: #{tpu_custom_call.1} parent=5 // pred_region
        // Predicated region
        $region21: #{tpu_custom_call.1} parent=19 // pred_check
          %p152 = pneg %p35
        $region22: #{tpu_custom_call.1} parent=19 // pred_check_branch
          %154 = sbr.rel (%p152) target = $region24
        $region23: #{tpu_custom_call.1} parent=19 // pred_region
          %s155 = smul.u32 32, %s15
          %p156 = scmp.lt.s32.totalorder %s155, 63
          %s157 = scalar_select %p156, %s155, 63
          %s158 = smul.addr %s157, 4
          %s159 = scalar_lea.vmem %s0, %s158
          %s160 = smul.u32 32, %s15
        $region24: #{tpu_custom_call.1} parent=19 // pred_fallthru
          _
      $region20: #{tpu_custom_call.1} parent=5 // pred_fallthru
        _
      %p161 = scmp.le.s32.totalorder 1, %s15
      %p162 = scmp.lt.s32.totalorder %s15, 3
      %p163 = pnand %p161, %p162
      %p164 = pneg %p163
      // Predicated region
      $region25: #{tpu_custom_call.1} parent=5 // pred_check
        _
      $region26: #{tpu_custom_call.1} parent=5 // pred_check_branch
        %166 = sbr.rel (%p163) target = $region28
      $region27: #{tpu_custom_call.1} parent=5 // pred_region
        %s167 = ssub.s32 %s15, 1
        %s168 = smul.u32 32, %s20
        %p169 = scmp.lt.s32.totalorder %s168, 63
        %s170 = scalar_select %p169, %s168, 63
        %s171 = smul.addr %s170, 4
        %s172 = scalar_lea.vmem %s0, %s171
        %p173 = pneg %p41
        %p174 = pneg %p38
        %p175 = pneg %p62
        %p176 = pneg %p59
        %p177 = pneg %p88
        %p178 = pneg %p85
        %s179 = sand.u32 %s75, 1
        %s180 = scalar_lea.sflag [#allocation3], %s179
        %s181 = sand.u32 %s75, 1
        %s182 = smul.addr %s181, 256
        %s183 = scalar_lea.vmem [#allocation2], %s182
        %p184 = pneg %p109
        %p185 = pneg %p106
        %p186 = pneg %p130
        %p187 = pneg %p127
        %s188 = smul.u32 32, %s20
        %p189 = scmp.lt.s32.totalorder %s188, 63
        %s190 = scalar_select %p189, %s188, 63
        %s191 = smul.addr %s190, 4
        %s192 = scalar_lea.vmem %s0, %s191
        %s193 = smul.u32 32, %s20
        %s194 = smul.u32 32, %s20
        %p196 = scmp.eq.s32.totalorder %s20, 0
        // Predicated region
        $region29: #{tpu_custom_call.1} parent=27 // pred_check
          %p197 = pneg %p196
        $region30: #{tpu_custom_call.1} parent=27 // pred_check_branch
          %199 = sbr.rel (%p197) target = $region32
        $region31: #{tpu_custom_call.1} parent=27 // pred_region
          %200 = vst [vmem:[#allocation4] sm:$0x1] 0.0
          %201 = vst [vmem:[#allocation6] sm:$0x1] 0.0
        $region32: #{tpu_custom_call.1} parent=27 // pred_fallthru
          _
        %v202 = vld [vmem:[%s192] sm:$0xf]
        %v203 = vld [vmem:[%s192 + $0x4] sm:$0xf]
        %v204 = vld [vmem:[%s192 + $0x8] sm:$0xf]
        %v205 = vld [vmem:[%s192 + $0xc] sm:$0xf]
        %v206 = vld [vmem:[%s192 + $0x10] sm:$0xf]
        %v207 = vld [vmem:[%s192 + $0x14] sm:$0xf]
        %v208 = vld [vmem:[%s192 + $0x18] sm:$0xf]
        %v209 = vld [vmem:[%s192 + $0x1c] sm:$0xf]
        %v210 = vld [vmem:[%s192 + $0x20] sm:$0xf]
        %v211 = vld [vmem:[%s192 + $0x24] sm:$0xf]
        %v212 = vld [vmem:[%s192 + $0x28] sm:$0xf]
        %v213 = vld [vmem:[%s192 + $0x2c] sm:$0xf]
        %v214 = vld [vmem:[%s192 + $0x30] sm:$0xf]
        %v215 = vld [vmem:[%s192 + $0x34] sm:$0xf]
        %v216 = vld [vmem:[%s192 + $0x38] sm:$0xf]
        %v217 = vld [vmem:[%s192 + $0x3c] sm:$0xf]
        %v218 = vld [vmem:[%s192 + $0x40] sm:$0xf]
        %v219 = vld [vmem:[%s192 + $0x44] sm:$0xf]
        %v220 = vld [vmem:[%s192 + $0x48] sm:$0xf]
        %v221 = vld [vmem:[%s192 + $0x4c] sm:$0xf]
        %v222 = vld [vmem:[%s192 + $0x50] sm:$0xf]
        %v223 = vld [vmem:[%s192 + $0x54] sm:$0xf]
        %v224 = vld [vmem:[%s192 + $0x58] sm:$0xf]
        %v225 = vld [vmem:[%s192 + $0x5c] sm:$0xf]
        %v226 = vld [vmem:[%s192 + $0x60] sm:$0xf]
        %v227 = vld [vmem:[%s192 + $0x64] sm:$0xf]
        %v228 = vld [vmem:[%s192 + $0x68] sm:$0xf]
        %v229 = vld [vmem:[%s192 + $0x6c] sm:$0xf]
        %v230 = vld [vmem:[%s192 + $0x70] sm:$0xf]
        %v231 = vld [vmem:[%s192 + $0x74] sm:$0xf]
        %v232 = vld [vmem:[%s192 + $0x78] sm:$0xf]
        %v233 = vld [vmem:[%s192 + $0x7c] sm:$0xf]
        %v234 = vld [vmem:[%s1] sm:$0xf]
        %v235 = vld [vmem:[%s1 + $0x4] sm:$0xf]
        %v236 = vld [vmem:[%s1 + $0x8] sm:$0xf]
        %v237 = vld [vmem:[%s1 + $0xc] sm:$0xf]
        %v238 = vld [vmem:[%s1 + $0x10] sm:$0x3]
        %v271 = vunpack.c.l.b16 %v202
        %v272 = vunpack.c.l.b16 %v203
        %v273 = vunpack.c.l.b16 %v204
        %v274 = vunpack.c.l.b16 %v205
        %v275 = vunpack.c.l.b16 %v206
        %v276 = vunpack.c.l.b16 %v207
        %v277 = vunpack.c.l.b16 %v208
        %v278 = vunpack.c.l.b16 %v209
        %v279 = vunpack.c.l.b16 %v210
        %v280 = vunpack.c.l.b16 %v211
        %v281 = vunpack.c.l.b16 %v212
        %v282 = vunpack.c.l.b16 %v213
        %v283 = vunpack.c.l.b16 %v214
        %v284 = vunpack.c.l.b16 %v215
        %v285 = vunpack.c.l.b16 %v216
        %v286 = vunpack.c.l.b16 %v217
        %v287 = vunpack.c.l.b16 %v218
        %v288 = vunpack.c.l.b16 %v219
        %v289 = vunpack.c.l.b16 %v220
        %v290 = vunpack.c.l.b16 %v221
        %v291 = vunpack.c.l.b16 %v222
        %v292 = vunpack.c.l.b16 %v223
        %v293 = vunpack.c.l.b16 %v224
        %v294 = vunpack.c.l.b16 %v225
        %v295 = vunpack.c.l.b16 %v226
        %v296 = vunpack.c.l.b16 %v227
        %v297 = vunpack.c.l.b16 %v228
        %v298 = vunpack.c.l.b16 %v229
        %v299 = vunpack.c.l.b16 %v230
        %v300 = vunpack.c.l.b16 %v231
        %v301 = vunpack.c.l.b16 %v232
        %v302 = vunpack.c.l.b16 %v233
        %v303 = vpack.c.b16 %v272, %v271
        %v304 = vpack.c.b16 %v274, %v273
        %v305 = vpack.c.b16 %v276, %v275
        %v306 = vpack.c.b16 %v278, %v277
        %v307 = vpack.c.b16 %v280, %v279
        %v308 = vpack.c.b16 %v282, %v281
        %v309 = vpack.c.b16 %v284, %v283
        %v310 = vpack.c.b16 %v286, %v285
        %v311 = vpack.c.b16 %v288, %v287
        %v312 = vpack.c.b16 %v290, %v289
        %v313 = vpack.c.b16 %v292, %v291
        %v314 = vpack.c.b16 %v294, %v293
        %v315 = vpack.c.b16 %v296, %v295
        %v316 = vpack.c.b16 %v298, %v297
        %v317 = vpack.c.b16 %v300, %v299
        %v318 = vpack.c.b16 %v302, %v301
        %v324 = vunpack.c.l.b16 %v234
        %v325 = vunpack.c.l.b16 %v235
        %v326 = vunpack.c.l.b16 %v236
        %v327 = vunpack.c.l.b16 %v237
        %v328 = vunpack.c.l.b16 %v238
        %v329 = vpack.c.b16 %v325, %v324
        %v330 = vpack.c.b16 %v327, %v326
        %v331 = vpack.c.b16 %v328, %v328
        %vm334 = vcmask 293888
        %v336 = vsel %vm334, %v303, 0
        %v339 = vsel %vm334, %v304, 0
        %v342 = vsel %vm334, %v305, 0
        %v345 = vsel %vm334, %v306, 0
        %v348 = vsel %vm334, %v307, 0
        %v351 = vsel %vm334, %v308, 0
        %v354 = vsel %vm334, %v309, 0
        %v357 = vsel %vm334, %v310, 0
        %v360 = vsel %vm334, %v311, 0
        %v363 = vsel %vm334, %v312, 0
        %v366 = vsel %vm334, %v313, 0
        %v369 = vsel %vm334, %v314, 0
        %v372 = vsel %vm334, %v315, 0
        %v375 = vsel %vm334, %v316, 0
        %v378 = vsel %vm334, %v317, 0
        %v381 = vsel %vm334, %v318, 0
        %vm383 = vcmask 1041408
        %v385 = vsel %vm383, %v331, 0
        %387 = vmatprep.subr.bf16.mxu0 0
        %388 = vmatpush1.bf16.msra.mxu0 %v329
        %389 = vmatprep.subr.bf16.mxu0 0
        %390 = vmatpush1.bf16.msra.mxu0 %v330
        %391 = vmatprep.subr.bf16.mxu0 0
        %392 = vmatpush1.bf16.msra.mxu0 %v385
        %393 = vmatprep.subr.bf16.mxu0 0
        %394 = vmatpush1.bf16.msra.mxu0 0
        %395 = vmatprep.subr.bf16.mxu0 0
        %396 = vmatpush1.bf16.msra.mxu0 0
        %397 = vmatprep.subr.bf16.mxu0 0
        %398 = vmatpush1.bf16.msra.mxu0 0
        %399 = vmatprep.subr.bf16.mxu0 0
        %400 = vmatpush1.bf16.msra.mxu0 0
        %401 = vmatprep.subr.bf16.mxu0 0
        %402 = vmatpush1.bf16.msra.mxu0 0
        %403 = vmatprep.subr.bf16.mxu0 0
        %404 = vmatpush1.bf16.msra.mxu0 0
        %405 = vmatprep.subr.bf16.mxu0 0
        %406 = vmatpush1.bf16.msra.mxu0 0
        %407 = vmatprep.subr.bf16.mxu0 0
        %408 = vmatpush1.bf16.msra.mxu0 0
        %409 = vmatprep.subr.bf16.mxu0 0
        %410 = vmatpush1.bf16.msra.mxu0 0
        %411 = vmatprep.subr.bf16.mxu0 0
        %412 = vmatpush1.bf16.msra.mxu0 0
        %413 = vmatprep.subr.bf16.mxu0 0
        %414 = vmatpush1.bf16.msra.mxu0 0
        %415 = vmatprep.subr.bf16.mxu0 0
        %416 = vmatpush1.bf16.msra.mxu0 0
        %417 = vmatprep.subr.bf16.mxu0 0
        %418 = vmatpush1.bf16.msra.mxu0 0
        %419 = vmatprep.mubr.bf16.mxu0 0
        %420 = vmatmul.mubr.bf16.gmra.mrb[0].mxu0 %v336
        %v421 = vpop.f32.mrb[0].mxu0
        %v422 = vadd.f32 0.0, %v421
        %v423 = vpop.f32.mrb[0].mxu0
        %v424 = vpop.f32.mrb[0].mxu0
        %v425 = vadd.f32 0.0, %v424
        %v426 = vpop.f32.mrb[0].mxu0
        %427 = vmatprep.mubr.bf16.mxu0 0
        %428 = vmatmul.mubr.bf16.gmra.mrb[0].mxu0 %v339
        %v429 = vpop.f32.mrb[0].mxu0
        %v430 = vadd.f32 0.0, %v429
        %v431 = vpop.f32.mrb[0].mxu0
        %v432 = vpop.f32.mrb[0].mxu0
        %v433 = vadd.f32 0.0, %v432
        %v434 = vpop.f32.mrb[0].mxu0
        %435 = vmatprep.mubr.bf16.mxu0 0
        %436 = vmatmul.mubr.bf16.gmra.mrb[0].mxu0 %v342
        %v437 = vpop.f32.mrb[0].mxu0
        %v438 = vadd.f32 0.0, %v437
        %v439 = vpop.f32.mrb[0].mxu0
        %v440 = vpop.f32.mrb[0].mxu0
        %v441 = vadd.f32 0.0, %v440
        %v442 = vpop.f32.mrb[0].mxu0
        %443 = vmatprep.mubr.bf16.mxu0 0
        %444 = vmatmul.mubr.bf16.gmra.mrb[0].mxu0 %v345
        %v445 = vpop.f32.mrb[0].mxu0
        %v446 = vadd.f32 0.0, %v445
        %v447 = vpop.f32.mrb[0].mxu0
        %v448 = vpop.f32.mrb[0].mxu0
        %v449 = vadd.f32 0.0, %v448
        %v450 = vpop.f32.mrb[0].mxu0
        %451 = vmatprep.mubr.bf16.mxu0 0
        %452 = vmatmul.mubr.bf16.gmra.mrb[0].mxu0 %v348
        %v453 = vpop.f32.mrb[0].mxu0
        %v454 = vadd.f32 0.0, %v453
        %v455 = vpop.f32.mrb[0].mxu0
        %v456 = vpop.f32.mrb[0].mxu0
        %v457 = vadd.f32 0.0, %v456
        %v458 = vpop.f32.mrb[0].mxu0
        %459 = vmatprep.mubr.bf16.mxu0 0
        %460 = vmatmul.mubr.bf16.gmra.mrb[0].mxu0 %v351
        %v461 = vpop.f32.mrb[0].mxu0
        %v462 = vadd.f32 0.0, %v461
        %v463 = vpop.f32.mrb[0].mxu0
        %v464 = vpop.f32.mrb[0].mxu0
        %v465 = vadd.f32 0.0, %v464
        %v466 = vpop.f32.mrb[0].mxu0
        %467 = vmatprep.mubr.bf16.mxu0 0
        %468 = vmatmul.mubr.bf16.gmra.mrb[0].mxu0 %v354
        %v469 = vpop.f32.mrb[0].mxu0
        %v470 = vadd.f32 0.0, %v469
        %v471 = vpop.f32.mrb[0].mxu0
        %v472 = vpop.f32.mrb[0].mxu0
        %v473 = vadd.f32 0.0, %v472
        %v474 = vpop.f32.mrb[0].mxu0
        %475 = vmatprep.mubr.bf16.mxu0 0
        %476 = vmatmul.mubr.bf16.gmra.mrb[0].mxu0 %v357
        %v477 = vpop.f32.mrb[0].mxu0
        %v478 = vadd.f32 0.0, %v477
        %v479 = vpop.f32.mrb[0].mxu0
        %v480 = vpop.f32.mrb[0].mxu0
        %v481 = vadd.f32 0.0, %v480
        %v482 = vpop.f32.mrb[0].mxu0
        %483 = vmatprep.mubr.bf16.mxu0 0
        %484 = vmatmul.mubr.bf16.gmra.mrb[0].mxu0 %v360
        %v485 = vpop.f32.mrb[0].mxu0
        %v486 = vadd.f32 0.0, %v485
        %v487 = vpop.f32.mrb[0].mxu0
        %v488 = vpop.f32.mrb[0].mxu0
        %v489 = vadd.f32 0.0, %v488
        %v490 = vpop.f32.mrb[0].mxu0
        %491 = vmatprep.mubr.bf16.mxu0 0
        %492 = vmatmul.mubr.bf16.gmra.mrb[0].mxu0 %v363
        %v493 = vpop.f32.mrb[0].mxu0
        %v494 = vadd.f32 0.0, %v493
        %v495 = vpop.f32.mrb[0].mxu0
        %v496 = vpop.f32.mrb[0].mxu0
        %v497 = vadd.f32 0.0, %v496
        %v498 = vpop.f32.mrb[0].mxu0
        %499 = vmatprep.mubr.bf16.mxu0 0
        %500 = vmatmul.mubr.bf16.gmra.mrb[0].mxu0 %v366
        %v501 = vpop.f32.mrb[0].mxu0
        %v502 = vadd.f32 0.0, %v501
        %v503 = vpop.f32.mrb[0].mxu0
        %v504 = vpop.f32.mrb[0].mxu0
        %v505 = vadd.f32 0.0, %v504
        %v506 = vpop.f32.mrb[0].mxu0
        %507 = vmatprep.mubr.bf16.mxu0 0
        %508 = vmatmul.mubr.bf16.gmra.mrb[0].mxu0 %v369
        %v509 = vpop.f32.mrb[0].mxu0
        %v510 = vadd.f32 0.0, %v509
        %v511 = vpop.f32.mrb[0].mxu0
        %v512 = vpop.f32.mrb[0].mxu0
        %v513 = vadd.f32 0.0, %v512
        %v514 = vpop.f32.mrb[0].mxu0
        %515 = vmatprep.mubr.bf16.mxu0 0
        %516 = vmatmul.mubr.bf16.gmra.mrb[0].mxu0 %v372
        %v517 = vpop.f32.mrb[0].mxu0
        %v518 = vadd.f32 0.0, %v517
        %v519 = vpop.f32.mrb[0].mxu0
        %v520 = vpop.f32.mrb[0].mxu0
        %v521 = vadd.f32 0.0, %v520
        %v522 = vpop.f32.mrb[0].mxu0
        %523 = vmatprep.mubr.bf16.mxu0 0
        %524 = vmatmul.mubr.bf16.gmra.mrb[0].mxu0 %v375
        %v525 = vpop.f32.mrb[0].mxu0
        %v526 = vadd.f32 0.0, %v525
        %v527 = vpop.f32.mrb[0].mxu0
        %v528 = vpop.f32.mrb[0].mxu0
        %v529 = vadd.f32 0.0, %v528
        %v530 = vpop.f32.mrb[0].mxu0
        %531 = vmatprep.mubr.bf16.mxu0 0
        %532 = vmatmul.mubr.bf16.gmra.mrb[0].mxu0 %v378
        %v533 = vpop.f32.mrb[0].mxu0
        %v534 = vadd.f32 0.0, %v533
        %v535 = vpop.f32.mrb[0].mxu0
        %v536 = vpop.f32.mrb[0].mxu0
        %v537 = vadd.f32 0.0, %v536
        %v538 = vpop.f32.mrb[0].mxu0
        %539 = vmatprep.mubr.bf16.mxu0 0
        %540 = vmatmul.mubr.bf16.gmra.mrb[0].mxu0 %v381
        %v541 = vpop.f32.mrb[0].mxu0
        %v542 = vadd.f32 0.0, %v541
        %v543 = vpop.f32.mrb[0].mxu0
        %v544 = vpop.f32.mrb[0].mxu0
        %v545 = vadd.f32 0.0, %v544
        %v546 = vpop.f32.mrb[0].mxu0
        %547 = vdwg.mxu0
        %548 = vst [vmem:[%s183] sm:$0xff] %v422
        %549 = vst [vmem:[%s183 + $0x8] sm:$0xff] %v425
        %550 = vst [vmem:[%s183 + $0x10] sm:$0xff] %v430
        %551 = vst [vmem:[%s183 + $0x18] sm:$0xff] %v433
        %552 = vst [vmem:[%s183 + $0x20] sm:$0xff] %v438
        %553 = vst [vmem:[%s183 + $0x28] sm:$0xff] %v441
        %554 = vst [vmem:[%s183 + $0x30] sm:$0xff] %v446
        %555 = vst [vmem:[%s183 + $0x38] sm:$0xff] %v449
        %556 = vst [vmem:[%s183 + $0x40] sm:$0xff] %v454
        %557 = vst [vmem:[%s183 + $0x48] sm:$0xff] %v457
        %558 = vst [vmem:[%s183 + $0x50] sm:$0xff] %v462
        %559 = vst [vmem:[%s183 + $0x58] sm:$0xff] %v465
        %560 = vst [vmem:[%s183 + $0x60] sm:$0xff] %v470
        %561 = vst [vmem:[%s183 + $0x68] sm:$0xff] %v473
        %562 = vst [vmem:[%s183 + $0x70] sm:$0xff] %v478
        %563 = vst [vmem:[%s183 + $0x78] sm:$0xff] %v481
        %564 = vst [vmem:[%s183 + $0x80] sm:$0xff] %v486
        %565 = vst [vmem:[%s183 + $0x88] sm:$0xff] %v489
        %566 = vst [vmem:[%s183 + $0x90] sm:$0xff] %v494
        %567 = vst [vmem:[%s183 + $0x98] sm:$0xff] %v497
        %568 = vst [vmem:[%s183 + $0xa0] sm:$0xff] %v502
        %569 = vst [vmem:[%s183 + $0xa8] sm:$0xff] %v505
        %570 = vst [vmem:[%s183 + $0xb0] sm:$0xff] %v510
        %571 = vst [vmem:[%s183 + $0xb8] sm:$0xff] %v513
        %572 = vst [vmem:[%s183 + $0xc0] sm:$0xff] %v518
        %573 = vst [vmem:[%s183 + $0xc8] sm:$0xff] %v521
        %574 = vst [vmem:[%s183 + $0xd0] sm:$0xff] %v526
        %575 = vst [vmem:[%s183 + $0xd8] sm:$0xff] %v529
        %576 = vst [vmem:[%s183 + $0xe0] sm:$0xff] %v534
        %577 = vst [vmem:[%s183 + $0xe8] sm:$0xff] %v537
        %578 = vst [vmem:[%s183 + $0xf0] sm:$0xff] %v542
        %579 = vst [vmem:[%s183 + $0xf8] sm:$0xff] %v545
        %v580 = vld [vmem:[#allocation4] sm:$0x1]
        %v581 = vadd.f32 %v422, %v425
        %v582 = vadd.f32 %v581, %v430
        %v583 = vadd.f32 %v582, %v433
        %v584 = vadd.f32 %v583, %v438
        %v585 = vadd.f32 %v584, %v441
        %v586 = vadd.f32 %v585, %v446
        %v587 = vadd.f32 %v586, %v449
        %v588 = vadd.f32 %v587, %v454
        %v589 = vadd.f32 %v588, %v457
        %v590 = vadd.f32 %v589, %v462
        %v591 = vadd.f32 %v590, %v465
        %v592 = vadd.f32 %v591, %v470
        %v593 = vadd.f32 %v592, %v473
        %v594 = vadd.f32 %v593, %v478
        %v595 = vadd.f32 %v594, %v481
        %v596 = vadd.f32 %v595, %v486
        %v597 = vadd.f32 %v596, %v489
        %v598 = vadd.f32 %v597, %v494
        %v599 = vadd.f32 %v598, %v497
        %v600 = vadd.f32 %v599, %v502
        %v601 = vadd.f32 %v600, %v505
        %v602 = vadd.f32 %v601, %v510
        %v603 = vadd.f32 %v602, %v513
        %v604 = vadd.f32 %v603, %v518
        %v605 = vadd.f32 %v604, %v521
        %v606 = vadd.f32 %v605, %v526
        %v607 = vadd.f32 %v606, %v529
        %v608 = vadd.f32 %v607, %v534
        %v609 = vadd.f32 %v608, %v537
        %v610 = vadd.f32 %v609, %v542
        %v611 = vadd.f32 %v610, %v545
        %v612 = vrot.slane %v611, 4
        %v613 = vadd.f32 %v611, %v612
        %v614 = vrot.slane %v613, 2
        %v615 = vadd.f32 %v613, %v614
        %v616 = vrot.slane %v615, 1
        %v617 = vadd.f32 %v615, %v616
        %v618 = vadd.f32 %v580, %v617
        %619 = vst [vmem:[#allocation4] sm:$0x1] %v618
        %v620 = vld [vmem:[#allocation6] sm:$0x1]
        %v621 = vmul.f32 %v422, %v422
        %v622 = vmul.f32 %v425, %v425
        %v623 = vmul.f32 %v430, %v430
        %v624 = vmul.f32 %v433, %v433
        %v625 = vmul.f32 %v438, %v438
        %v626 = vmul.f32 %v441, %v441
        %v627 = vmul.f32 %v446, %v446
        %v628 = vmul.f32 %v449, %v449
        %v629 = vmul.f32 %v454, %v454
        %v630 = vmul.f32 %v457, %v457
        %v631 = vmul.f32 %v462, %v462
        %v632 = vmul.f32 %v465, %v465
        %v633 = vmul.f32 %v470, %v470
        %v634 = vmul.f32 %v473, %v473
        %v635 = vmul.f32 %v478, %v478
        %v636 = vmul.f32 %v481, %v481
        %v637 = vmul.f32 %v486, %v486
        %v638 = vmul.f32 %v489, %v489
        %v639 = vmul.f32 %v494, %v494
        %v640 = vmul.f32 %v497, %v497
        %v641 = vmul.f32 %v502, %v502
        %v642 = vmul.f32 %v505, %v505
        %v643 = vmul.f32 %v510, %v510
        %v644 = vmul.f32 %v513, %v513
        %v645 = vmul.f32 %v518, %v518
        %v646 = vmul.f32 %v521, %v521
        %v647 = vmul.f32 %v526, %v526
        %v648 = vmul.f32 %v529, %v529
        %v649 = vmul.f32 %v534, %v534
        %v650 = vmul.f32 %v537, %v537
        %v651 = vmul.f32 %v542, %v542
        %v652 = vmul.f32 %v545, %v545
        %v653 = vadd.f32 %v621, %v622
        %v654 = vadd.f32 %v653, %v623
        %v655 = vadd.f32 %v654, %v624
        %v656 = vadd.f32 %v655, %v625
        %v657 = vadd.f32 %v656, %v626
        %v658 = vadd.f32 %v657, %v627
        %v659 = vadd.f32 %v658, %v628
        %v660 = vadd.f32 %v659, %v629
        %v661 = vadd.f32 %v660, %v630
        %v662 = vadd.f32 %v661, %v631
        %v663 = vadd.f32 %v662, %v632
        %v664 = vadd.f32 %v663, %v633
        %v665 = vadd.f32 %v664, %v634
        %v666 = vadd.f32 %v665, %v635
        %v667 = vadd.f32 %v666, %v636
        %v668 = vadd.f32 %v667, %v637
        %v669 = vadd.f32 %v668, %v638
        %v670 = vadd.f32 %v669, %v639
        %v671 = vadd.f32 %v670, %v640
        %v672 = vadd.f32 %v671, %v641
        %v673 = vadd.f32 %v672, %v642
        %v674 = vadd.f32 %v673, %v643
        %v675 = vadd.f32 %v674, %v644
        %v676 = vadd.f32 %v675, %v645
        %v677 = vadd.f32 %v676, %v646
        %v678 = vadd.f32 %v677, %v647
        %v679 = vadd.f32 %v678, %v648
        %v680 = vadd.f32 %v679, %v649
        %v681 = vadd.f32 %v680, %v650
        %v682 = vadd.f32 %v681, %v651
        %v683 = vadd.f32 %v682, %v652
        %v684 = vrot.slane %v683, 4
        %v685 = vadd.f32 %v683, %v684
        %v686 = vrot.slane %v685, 2
        %v687 = vadd.f32 %v685, %v686
        %v688 = vrot.slane %v687, 1
        %v689 = vadd.f32 %v687, %v688
        %v690 = vadd.f32 %v620, %v689
        %691 = vst [vmem:[#allocation6] sm:$0x1] %v690
        %s692 = sand.u32 %s75, 1
        %s693 = scalar_lea.sflag [#allocation3], %s692
        %s694 = sand.u32 %s75, 1
        %s695 = smul.addr %s694, 256
        %s696 = scalar_lea.vmem [#allocation2], %s695
        // Predicated region
        $region33: #{tpu_custom_call.1} parent=27 // pred_check
          %p697 = pneg %p85
        $region34: #{tpu_custom_call.1} parent=27 // pred_check_branch
          %699 = sbr.rel (%p697) target = $region36
        $region35: #{tpu_custom_call.1} parent=27 // pred_region
          %s700 = smul.u32 32, %s20
          %s702 = ssub.s32 4096, 4096
          %703 = vsyncadd %s693, %s702
          %s704 = smul.addr %s700, 128
          %s705 = scalar_lea.hbm %s2, %s704
          %s706 = sshll.u32 %s696, 4
          %s707 = int_to_ptr.vmem [resolvable:$true] %s706
          %712 = dma.vmem_to_hbm [thread:$0]  %s707, 4096, %s705, %s693, 128, 128, 8
        $region36: #{tpu_custom_call.1} parent=27 // pred_fallthru
          _
        // Predicated region
        $region37: #{tpu_custom_call.1} parent=27 // pred_check
          %p713 = pneg %p106
        $region38: #{tpu_custom_call.1} parent=27 // pred_check_branch
          %715 = sbr.rel (%p713) target = $region40
        $region39: #{tpu_custom_call.1} parent=27 // pred_region
          %s717 = ssub.s32 16, 16
          %718 = vsyncadd [#allocation5], %s717
          %s720 = sshll.u32 [#allocation4], 4
          %s721 = int_to_ptr.vmem [resolvable:$true] %s720
          %723 = dma.vmem_to_hbm [thread:$0]  %s721, 16, %s3, [#allocation5]
        $region40: #{tpu_custom_call.1} parent=27 // pred_fallthru
          _
        // Predicated region
        $region41: #{tpu_custom_call.1} parent=27 // pred_check
          %p724 = pneg %p127
        $region42: #{tpu_custom_call.1} parent=27 // pred_check_branch
          %726 = sbr.rel (%p724) target = $region44
        $region43: #{tpu_custom_call.1} parent=27 // pred_region
          %s728 = ssub.s32 16, 16
          %729 = vsyncadd [#allocation5], %s728
          %s731 = sshll.u32 [#allocation6], 4
          %s732 = int_to_ptr.vmem [resolvable:$true] %s731
          %734 = dma.vmem_to_hbm [thread:$0]  %s732, 16, %s4, [#allocation5]
        $region44: #{tpu_custom_call.1} parent=27 // pred_fallthru
          _
        // Predicated region
        $region45: #{tpu_custom_call.1} parent=27 // pred_check
          %p735 = pneg %p106
        $region46: #{tpu_custom_call.1} parent=27 // pred_check_branch
          %737 = sbr.rel (%p735) target = $region48
        $region47: #{tpu_custom_call.1} parent=27 // pred_region
          %738 = dma.done [#allocation5], 16
        $region48: #{tpu_custom_call.1} parent=27 // pred_fallthru
          _
        // Predicated region
        $region49: #{tpu_custom_call.1} parent=27 // pred_check
          %p739 = pneg %p127
        $region50: #{tpu_custom_call.1} parent=27 // pred_check_branch
          %741 = sbr.rel (%p739) target = $region52
        $region51: #{tpu_custom_call.1} parent=27 // pred_region
          %742 = dma.done [#allocation5], 16
        $region52: #{tpu_custom_call.1} parent=27 // pred_fallthru
          _
      $region28: #{tpu_custom_call.1} parent=5 // pred_fallthru
        _
      %p743 = scmp.le.s32.totalorder 2, %s15
      // Predicated region
      $region53: #{tpu_custom_call.1} parent=5 // pred_check
        %p744 = pneg %p743
      $region54: #{tpu_custom_call.1} parent=5 // pred_check_branch
        %746 = sbr.rel (%p744) target = $region56
      $region55: #{tpu_custom_call.1} parent=5 // pred_region
        %s747 = ssub.s32 %s15, 2
        // Predicated region
        $region57: #{tpu_custom_call.1} parent=55 // pred_check
          %p748 = pneg %p91
        $region58: #{tpu_custom_call.1} parent=55 // pred_check_branch
          %750 = sbr.rel (%p748) target = $region60
        $region59: #{tpu_custom_call.1} parent=55 // pred_region
          %s751 = sand.u32 %s76, 1
          %s752 = scalar_lea.sflag [#allocation3], %s751
          %s753 = sand.u32 %s76, 1
          %s754 = smul.addr %s753, 256
          %s755 = scalar_lea.vmem [#allocation2], %s754
          %756 = dma.done %s752, 4096
        $region60: #{tpu_custom_call.1} parent=55 // pred_fallthru
          _
      $region56: #{tpu_custom_call.1} parent=5 // pred_fallthru
        _
    $region6: #{tpu_custom_call.1} parent=1 // loop_footer
      %s19 = sadd.s32 1, %s15
    $region7: #{tpu_custom_call.1} parent=1 // loop_footer_branch
      %14 = sbr.rel target = $region3
    $region8: #{tpu_custom_call.1} parent=1 // loop_exit
      _
    %757 = vsyncpa [#allocation3], 1
    %s758 = scalar_lea.sflag [#allocation3], 1
    %759 = vsyncpa %s758, 1
    %760 = vsyncpa [#allocation5], 1

</llo_original>
